<compile_context>
chip_gen: v7x
topology: tpu7x:2x2x1
jax: 0.10.0
libtpu: 0.0.40
codegen_flags: <defaults>
</compile_context>

<pallas_src>
import functools
import math

import jax
import jax.numpy as jnp
from jax.experimental import pallas as pl
from jax.experimental.pallas import tpu as pltpu


def _device_kind() -> str:
    try:
        return jax.devices()[0].device_kind.lower()
    except Exception:
        return ""


_KIND = _device_kind()
_IS_V5E = ("v5 lite" in _KIND) or ("v5e" in _KIND) or ("v5litepod" in _KIND)
_IS_V7 = ("7x" in _KIND) or ("v7" in _KIND) or ("tpu7" in _KIND)

# Target bytes of input per grid step (double-buffered in+out stays well under
# the default scoped VMEM on every generation: v5e 16 MiB, v6e 32 MiB, v7x 32 MiB).
if _IS_V7:
    _TILE_BYTES = 4 * 1024 * 1024
elif _IS_V5E:
    _TILE_BYTES = 1 * 1024 * 1024
else:
    _TILE_BYTES = 2 * 1024 * 1024


def _hard_sigmoid_kernel(x_ref, o_ref, *, compute_dtype):
    # compute_dtype is bf16 on bf16-native VPUs (v6e/v7x) when the input is bf16,
    # f32 otherwise (v5e's VPU decomposes bf16 ops).
    x = x_ref[...].astype(compute_dtype)
    y = jnp.clip(x + 3.0, 0.0, 6.0) * (1.0 / 6.0)
    o_ref[...] = y.astype(o_ref.dtype)


def _run_slab(x2d: jax.Array, compute_dtype, total: int) -> jax.Array:
    """Row-tiled elementwise pass over a lane-dense (rows, cols) slab."""
    rows, cols = x2d.shape
    itemsize = jnp.dtype(x2d.dtype).itemsize
    tile_rows = max(8, _TILE_BYTES // (cols * itemsize))   # power of two, multiple of 8

    if rows <= tile_rows:
        # Single block covering the full slab (block rows == array rows, so the
        # (8,128) rule is satisfied even for odd row counts).
        tm = rows
        grid = 1
    else:
        tm = tile_rows
        grid = pl.cdiv(rows, tm)   # partial last block is masked by Pallas -> no padding

    # Shard independent row-tiles across both TensorCores on v7x; neutral elsewhere.
    if _IS_V7 and grid > 1:
        dim_sem = (getattr(pltpu, "CORE_PARALLEL", pltpu.PARALLEL),)
    else:
        dim_sem = (pltpu.PARALLEL,)

    kernel = functools.partial(_hard_sigmoid_kernel, compute_dtype=compute_dtype)
    return pl.pallas_call(
        kernel,
        out_shape=jax.ShapeDtypeStruct((rows, cols), x2d.dtype),
        grid_spec=pl.GridSpec(
            grid=(grid,),
            in_specs=[pl.BlockSpec((tm, cols), lambda i: (i, 0))],
            out_specs=pl.BlockSpec((tm, cols), lambda i: (i, 0)),
        ),
        compiler_params=pltpu.CompilerParams(dimension_semantics=dim_sem),
        cost_estimate=pl.CostEstimate(
            flops=4 * total,
            transcendentals=0,
            bytes_accessed=2 * total * itemsize,
        ),
    )(x2d)


def hard_sigmoid(x: jax.Array) -> jax.Array:
    """Pallas TPU hard-sigmoid. Elementwise; works for any shape (NCHW in -> NCHW out)."""
    orig_shape = x.shape
    total = math.prod(orig_shape) if len(orig_shape) else 1
    if total == 0:
        return x  # empty tensor: nothing to do

    # Compute dtype: stay in bf16 on bf16-native VPUs, f32 everywhere else.
    if x.dtype == jnp.bfloat16 and not _IS_V5E:
        compute_dtype = jnp.bfloat16
    else:
        compute_dtype = jnp.float32

    # Zero-copy path: pick the widest lane-dense column count dividing `total`.
    cols = 0
    for c in (512, 256, 128):
        if total % c == 0:
            cols = c
            break

    if cols:
        x2d = x.reshape(total // cols, cols)          # contiguous reshape: no copy
        out2d = _run_slab(x2d, compute_dtype, total)
        return out2d.reshape(orig_shape)

    # Rare ragged case (total not a multiple of 128): pad the flat array by <128
    # elements and slice afterwards. Padded garbage is clamped and discarded.
    # TODO(synk): process the <128-element tail separately to avoid these two
    # extra HBM passes even in this rare case.
    cols = 128
    padded = pl.cdiv(total, cols) * cols
    flat = jnp.pad(x.reshape(total), (0, padded - total))
    out2d = _run_slab(flat.reshape(padded // cols, cols), compute_dtype, total)
    return out2d.reshape(padded)[:total].reshape(orig_shape)


def _reference_hard_sigmoid(x):
    return jnp.clip(x.astype(jnp.float32) + 3.0, 0.0, 6.0) / 6.0


if __name__ == "__main__":
    key = jax.random.PRNGKey(0)

    # Primary: small NCHW activation (zero-copy single-block path).
    x = jax.random.normal(key, (2, 4, 16, 16), dtype=jnp.float32) * 4.0
    y = hard_sigmoid(x)
    jax.block_until_ready(y)
    assert y.shape == x.shape and y.dtype == x.dtype
    assert jnp.allclose(y, _reference_hard_sigmoid(x), atol=1e-6, rtol=1e-6)

    # Ragged total (945 elements, not a multiple of 128): exercises the pad fallback.
    x2 = jax.random.normal(jax.random.PRNGKey(1), (3, 5, 7, 9), dtype=jnp.float32) * 4.0
    y2 = hard_sigmoid(x2)
    jax.block_until_ready(y2)
    assert y2.shape == x2.shape and y2.dtype == x2.dtype
    assert jnp.allclose(y2, _reference_hard_sigmoid(x2), atol=1e-6, rtol=1e-6)

    # Multi-tile path: rows not a multiple of the tile -> masked partial last block,
    # no padding anywhere in the wrapper.
    x3 = jax.random.normal(jax.random.PRNGKey(2), (8, 32, 56, 56), dtype=jnp.float32) * 4.0
    y3 = hard_sigmoid(x3)
    jax.block_until_ready(y3)
    assert jnp.allclose(y3, _reference_hard_sigmoid(x3), atol=1e-6, rtol=1e-6)

    # bf16 input (native bf16 compute on v6e/v7x, f32 compute on v5e).
    x4 = (jax.random.normal(jax.random.PRNGKey(3), (2, 8, 16, 16)) * 4.0).astype(jnp.bfloat16)
    y4 = hard_sigmoid(x4)
    jax.block_until_ready(y4)
    assert y4.shape == x4.shape and y4.dtype == jnp.bfloat16
    assert jnp.allclose(y4.astype(jnp.float32),
                        _reference_hard_sigmoid(x4.astype(jnp.float32)),
                        atol=2e-2, rtol=0)

    print("KERNEL_OK")
</pallas_src>

<mosaic_0001>
module attributes {stable_mosaic.version = 11 : i64} {
  func.func @_hard_sigmoid_kernel(%arg0: i32, %arg1: memref<4x512xf32, #tpu.memory_space<vmem>>, %arg2: memref<4x512xf32, #tpu.memory_space<vmem>>) attributes {dimension_semantics = [#tpu.dimension_semantics<parallel>], iteration_bounds = array<i64: 1>, scalar_prefetch = 0 : i64, scratch_operands = 0 : i64, tpu.core_type = #tpu.core_type<tc>, window_params = [{transform_indices = @transform_0, window_bounds = array<i64: 4, 512>}, {transform_indices = @transform_1, window_bounds = array<i64: 4, 512>}]} {
    %c0 = arith.constant 0 : index
    %c0_0 = arith.constant 0 : index
    %0 = vector.load %arg1[%c0, %c0_0] : memref<4x512xf32, #tpu.memory_space<vmem>>, vector<4x512xf32>
    %cst = arith.constant 3.000000e+00 : f32
    %1 = vector.broadcast %cst : f32 to vector<4x512xf32>
    %2 = arith.addf %0, %1 : vector<4x512xf32>
    %cst_1 = arith.constant 0.000000e+00 : f32
    %cst_2 = arith.constant 6.000000e+00 : f32
    %3 = vector.broadcast %cst_1 : f32 to vector<4x512xf32>
    %4 = arith.maximumf %3, %2 : vector<4x512xf32>
    %5 = vector.broadcast %cst_2 : f32 to vector<4x512xf32>
    %6 = arith.minimumf %5, %4 : vector<4x512xf32>
    %cst_3 = arith.constant 0.166666672 : f32
    %7 = vector.broadcast %cst_3 : f32 to vector<4x512xf32>
    %8 = arith.mulf %6, %7 : vector<4x512xf32>
    %c0_4 = arith.constant 0 : index
    %c0_5 = arith.constant 0 : index
    %9 = vector.load %arg2[%c0_4, %c0_5] : memref<4x512xf32, #tpu.memory_space<vmem>>, vector<4x512xf32>
    tpu.vector_store %arg2[%c0_4, %c0_5], %8 {strides = array<i32>} : memref<4x512xf32, #tpu.memory_space<vmem>>, vector<4x512xf32>,
    return
  }
  func.func @transform_0(%arg0: i32) -> (i32, i32) {
    %c0_i32 = arith.constant 0 : i32
    %c0_i32_0 = arith.constant 0 : i32
    return %arg0, %c0_i32 : i32, i32
  }
  func.func @transform_1(%arg0: i32) -> (i32, i32) {
    %c0_i32 = arith.constant 0 : i32
    %c0_i32_0 = arith.constant 0 : i32
    return %arg0, %c0_i32 : i32, i32
  }
}

</mosaic_0001>

<llo_original>
// kernel: tpu_custom_call.1
$region0: #{tpu_custom_call.1}
  #allocation0 [shape = 'u32[]', space=smem, size = 0x4, offset = 0x4, fixed_abs, tag = 'smem constant byte address 0x4 - core index']
  #allocation1 [shape = 'u32[144,128]{1,0:T(1,128)}', space=vmem, size = 0x12000, scoped, tag = 'internal scratch']
  %s0 = inlined_call_operand.hbm [shape: f32[4,512], index: 0, kind: input, shape index: {}]
  %s1 = inlined_call_operand.hbm [shape: f32[4,512], index: 1, kind: output, shape index: {}]
  %s2 = sld [smem:[#allocation0]]
  $region18: #{tpu_custom_call.1} parent=0
    _
  %s4 = ssub.s32 1, %s2
  %s5 = scalar_select 0, %s4, %s2
  $region1: #{tpu_custom_call.1} parent=0
    #allocation2 [shape = 'u8[8192]{0}', space=vmem, size = 0x2000, scoped, tag = 'input window, operand 0, single buffered']
    #allocation3 [shape = 's32[1]{0}', space=sflag, size = 0x4, scoped, tag = 'scoped memory for tpu_custom_call.1']
    #allocation4 [shape = 's32[1]{0}', space=sflag, size = 0x4, scoped, tag = 'scoped memory for tpu_custom_call.1']
    #allocation5 [shape = 'u8[8192]{0}', space=vmem, size = 0x2000, scoped, tag = 'output window, operand 0, single buffered']
    %6 = vsyncpa [#allocation3], 0
    %7 = vsyncpa [#allocation4], 0
    // Predicated region
    $region2: #{tpu_custom_call.1} parent=1 // pred_check
      _
    $region3: #{tpu_custom_call.1} parent=1 // pred_check_branch
      %9 = sbr.rel (0) target = $region5
    $region4: #{tpu_custom_call.1} parent=1 // pred_region
      %s11 = ssub.s32 256, 256
      %12 = vsyncadd [#allocation3], %s11
      %s14 = sshll.u32 [#allocation2], 4
      %s15 = int_to_ptr.vmem [resolvable:$true] %s14
      %17 = dma.hbm_to_vmem [thread:$0]  %s0, 256, %s15, [#allocation3]
    $region5: #{tpu_custom_call.1} parent=1 // pred_fallthru
      _
    // Predicated region
    $region6: #{tpu_custom_call.1} parent=1 // pred_check
      _
    $region7: #{tpu_custom_call.1} parent=1 // pred_check_branch
      %19 = sbr.rel (0) target = $region9
    $region8: #{tpu_custom_call.1} parent=1 // pred_region
      %20 = dma.done [#allocation3], 256
    $region9: #{tpu_custom_call.1} parent=1 // pred_fallthru
      _
    %v21 = vld [vmem:[#allocation2] sm:$0xff]
    %v22 = vld [vmem:[#allocation2 + $0x8] sm:$0xff]
    %v23 = vadd.f32 %v21, 3.0
    %v24 = vadd.f32 %v22, 3.0
    %v25 = vmax.f32 %v23, 0.0
    %v26 = vmax.f32 %v24, 0.0
    %v27 = vmin.f32 %v25, 6.0
    %v28 = vmin.f32 %v26, 6.0
    %v29 = vmul.f32 %v27, 0.16666667
    %v30 = vmul.f32 %v28, 0.16666667
    %31 = vst [vmem:[#allocation5] sm:$0xff] %v29
    %32 = vst [vmem:[#allocation5 + $0x8] sm:$0xff] %v30
    // Predicated region
    $region10: #{tpu_custom_call.1} parent=1 // pred_check
      _
    $region11: #{tpu_custom_call.1} parent=1 // pred_check_branch
      %34 = sbr.rel (0) target = $region13
    $region12: #{tpu_custom_call.1} parent=1 // pred_region
      %s36 = ssub.s32 256, 256
      %37 = vsyncadd [#allocation4], %s36
      %s39 = sshll.u32 [#allocation5], 4
      %s40 = int_to_ptr.vmem [resolvable:$true] %s39
      %42 = dma.vmem_to_hbm [thread:$0]  %s40, 256, %s1, [#allocation4]
    $region13: #{tpu_custom_call.1} parent=1 // pred_fallthru
      _
    // Predicated region
    $region14: #{tpu_custom_call.1} parent=1 // pred_check
      _
    $region15: #{tpu_custom_call.1} parent=1 // pred_check_branch
      %44 = sbr.rel (0) target = $region17
    $region16: #{tpu_custom_call.1} parent=1 // pred_region
      %45 = dma.done [#allocation4], 256
    $region17: #{tpu_custom_call.1} parent=1 // pred_fallthru
      _
    %46 = vsyncpa [#allocation3], 1
    %47 = vsyncpa [#allocation4], 1

</llo_original>
